<compile_context>
chip_gen: v6e
topology: v6e:2x2x1
jax: 0.10.0
libtpu: 0.0.40
codegen_flags: <defaults>
</compile_context>

<pallas_src>
import functools

import jax
import jax.numpy as jnp
from jax.experimental import pallas as pl
from jax.experimental.pallas import tpu as pltpu


_LANE = 128


def _round_up(a: int, b: int) -> int:
    return (a + b - 1) // b * b


def _choose_tile_b(batch: int, tile_b_max: int) -> int:
    """Pick a lane-aligned batch tile: >=2 grid steps when possible (v7x
    megacore), >=4 steps for big batches (DMA hiding), never below 128."""
    b_lane = _round_up(batch, _LANE)
    tile = min(_round_up(tile_b_max, _LANE), b_lane)
    tile = max(_LANE, (tile // _LANE) * _LANE)
    # >= 2 grid steps when the batch is big enough.
    if b_lane >= 2 * _LANE:
        while tile > _LANE and _round_up(batch, tile) // tile < 2:
            tile //= 2
    # >= 4 steps for larger batches, but never shrink below 512 lanes just to
    # manufacture steps (per-step overhead ~0.35 us).
    while tile > 512 and _round_up(batch, tile) // tile < 4:
        tile //= 2
    return max(_LANE, (tile // _LANE) * _LANE)


def _net_with_re_kernel(xz_ref, w1f_ref, b1_ref, w2u_ref, b2_ref, o_ref,
                        *, in_pad: int, g_pad: int):
    """Transposed (batch-on-lanes) fused forward for one batch tile.

    xz_ref : (f_pad, tile_b)  bf16   streamed  [x | Z]^T (feature-padded)
    w1f_ref: (32, f_pad)      bf16   resident  [W1 | 0]
    b1_ref : (32, 1)          f32    resident
    w2u_ref: (32 + g_pad -> out) i.e. (out, 32 + g_pad) bf16 resident [W2 | U^T]
    b2_ref : (out, 1)         f32    resident
    o_ref  : (out, tile_b)    f32    streamed out (lane-dense)
    """
    # fc1: h^T = relu(W1 @ x^T + b1).  W1f has zero columns over the Z rows,
    # so contracting over the full f_pad feature axis equals W1 @ x^T exactly.
    h = jnp.dot(w1f_ref[...], xz_ref[...], preferred_element_type=jnp.float32)
    h = jnp.maximum(h + b1_ref[...], 0.0)               # (32, tile_b) f32

    # dropout(0.5): identity at inference time.
    # TODO(synk): training-mode dropout (stochastic masking via pltpu.prng_*)
    # is not implemented; forward here matches model.eval().

    # Fused fc2 + random effects: [W2 | U^T] @ [relu(h)^T ; Z^T] + b2.
    z_t = xz_ref[pl.ds(in_pad, g_pad), :]                # (g_pad, tile_b) bf16
    hz = jnp.concatenate([h.astype(w2u_ref.dtype), z_t], axis=0)
    y = jnp.dot(w2u_ref[...], hz, preferred_element_type=jnp.float32)
    o_ref[...] = (y + b2_ref[...]).astype(o_ref.dtype)   # lane-dense store


def net_with_re_forward(x, Z, W1, b1, W2, b2, U, *, tile_b=4096):
    """Fused forward pass.

    x: (B, input_size), Z: (B, group_number), W1: (32, input_size),
    b1: (32,), W2: (output_size, 32), b2: (output_size,),
    U: (group_number, output_size).  Returns (B, output_size) float32.
    """
    B, in_size = x.shape
    G = Z.shape[1]
    hidden = W1.shape[0]
    out_size = W2.shape[0]

    # Feature padding: multiples of 16 rows (clean bf16 sublane packing and a
    # clean slice boundary between the x and Z blocks of the streamed input).
    in_pad = _round_up(in_size, 16)
    g_pad = _round_up(G, 16)
    f_pad = in_pad + g_pad

    # --- VMEM-resident parameters (bf16 for the MXU; biases stay f32) -------
    w1f = jnp.zeros((hidden, f_pad), jnp.bfloat16)
    w1f = w1f.at[:, :in_size].set(W1.astype(jnp.bfloat16))          # [W1 | 0]
    w2u = jnp.zeros((out_size, hidden + g_pad), jnp.bfloat16)
    w2u = w2u.at[:, :hidden].set(W2.astype(jnp.bfloat16))
    w2u = w2u.at[:, hidden:hidden + G].set(U.T.astype(jnp.bfloat16))  # [W2 | U^T]
    b1c = b1.reshape(hidden, 1).astype(jnp.float32)
    b2c = b2.reshape(out_size, 1).astype(jnp.float32)

    # --- batch tiling (batch on the lane axis) -------------------------------
    tile = _choose_tile_b(B, tile_b)
    b_pad = _round_up(B, tile)

    # --- single streamed input [x | Z]^T in bf16 ------------------------------
    xp = jnp.pad(x.astype(jnp.bfloat16), ((0, b_pad - B), (0, in_pad - in_size)))
    zp = jnp.pad(Z.astype(jnp.bfloat16), ((0, b_pad - B), (0, g_pad - G)))
    xzT = jnp.concatenate([xp, zp], axis=1).T            # (f_pad, b_pad)

    grid = (b_pad // tile,)

    # Double-buffered streamed tiles + resident params; tiny, but set the
    # limit explicitly so v7x (64 MiB physical / 32 MiB scoped) never OOMs.
    stream_bytes = 2 * (f_pad * tile * 2 + out_size * tile * 4)
    param_bytes = (hidden * f_pad + out_size * (hidden + g_pad)) * 2 \
        + (hidden + out_size) * 4
    vmem_limit = int(min(48 << 20, max(16 << 20, 4 * (stream_bytes + param_bytes))))

    flops = 2 * b_pad * (f_pad * hidden + (hidden + g_pad) * out_size)
    bytes_accessed = (
        f_pad * b_pad * 2                      # bf16 [x|Z]^T reads
        + out_size * b_pad * 4                 # f32 output writes
        + (hidden * f_pad + out_size * (hidden + g_pad)) * 2   # bf16 params
        + (hidden + out_size) * 4              # f32 biases
    )

    kernel = functools.partial(_net_with_re_kernel, in_pad=in_pad, g_pad=g_pad)

    out_t = pl.pallas_call(
        kernel,
        out_shape=jax.ShapeDtypeStruct((out_size, b_pad), jnp.float32),
        grid_spec=pltpu.PrefetchScalarGridSpec(
            num_scalar_prefetch=0,
            grid=grid,
            in_specs=[
                # streamed per-tile input (batch on lanes)
                pl.BlockSpec((f_pad, tile), lambda i: (0, i)),            # [x|Z]^T
                # VMEM-resident parameters (constant block index -> no re-DMA)
                pl.BlockSpec((hidden, f_pad), lambda i: (0, 0)),          # [W1|0]
                pl.BlockSpec((hidden, 1), lambda i: (0, 0)),              # b1
                pl.BlockSpec((out_size, hidden + g_pad), lambda i: (0, 0)),  # [W2|U^T]
                pl.BlockSpec((out_size, 1), lambda i: (0, 0)),            # b2
            ],
            out_specs=pl.BlockSpec((out_size, tile), lambda i: (0, i)),   # lane-dense
        ),
        compiler_params=pltpu.CompilerParams(
            dimension_semantics=("parallel",),
            vmem_limit_bytes=vmem_limit,
        ),
        cost_estimate=pl.CostEstimate(
            flops=flops, transcendentals=0, bytes_accessed=bytes_accessed),
    )(xzT, w1f, b1c, w2u, b2c)

    # Transpose once in the wrapper back to the module's (B, output_size).
    return out_t.T[:B]


def _reference_forward_f32(x, Z, W1, b1, W2, b2, U):
    """Pure-f32 reference (exact PyTorch eval-mode semantics)."""
    h = jnp.maximum(x @ W1.T + b1, 0.0)
    y = h @ W2.T + b2
    return y + Z @ U


def _reference_forward_matched(x, Z, W1, b1, W2, b2, U):
    """Reference using the same bf16 input / f32 accumulation recipe as the kernel."""
    xb = x.astype(jnp.bfloat16)
    zb = Z.astype(jnp.bfloat16)
    w1t = W1.T.astype(jnp.bfloat16)
    w2t = W2.T.astype(jnp.bfloat16)
    u = U.astype(jnp.bfloat16)
    h = jnp.dot(xb, w1t, preferred_element_type=jnp.float32) + b1
    h = jnp.maximum(h, 0.0).astype(jnp.bfloat16)
    y = jnp.dot(h, w2t, preferred_element_type=jnp.float32) + b2
    re = jnp.dot(zb, u, preferred_element_type=jnp.float32)
    return y + re


if __name__ == "__main__":
    # Small shapes consistent with the module.
    batch = 8
    input_size = 16
    hidden = 32                 # fixed by the module (fc1 -> 32)
    output_size = 8
    group_number = 4
    num_random_effects = output_size  # so fc2(x) + random_effects(Z) is shape-exact

    key = jax.random.PRNGKey(0)
    kx, kz, kw1, kb1, kw2, kb2, ku = jax.random.split(key, 7)

    x = jax.random.normal(kx, (batch, input_size), dtype=jnp.float32)
    # Z: one-hot group-membership design matrix (batch, group_number).
    groups = jax.random.randint(kz, (batch,), 0, group_number)
    Z = jax.nn.one_hot(groups, group_number, dtype=jnp.float32)

    # Deterministic parameter init (uniform, PyTorch-Linear-style scaling).
    W1 = jax.random.uniform(kw1, (hidden, input_size), jnp.float32,
                            -1.0 / input_size**0.5, 1.0 / input_size**0.5)
    b1 = jax.random.uniform(kb1, (hidden,), jnp.float32,
                            -1.0 / input_size**0.5, 1.0 / input_size**0.5)
    W2 = jax.random.uniform(kw2, (output_size, hidden), jnp.float32,
                            -1.0 / hidden**0.5, 1.0 / hidden**0.5)
    b2 = jax.random.uniform(kb2, (output_size,), jnp.float32,
                            -1.0 / hidden**0.5, 1.0 / hidden**0.5)
    U = jax.random.normal(ku, (group_number, num_random_effects),
                          dtype=jnp.float32) * 0.1

    out = net_with_re_forward(x, Z, W1, b1, W2, b2, U)
    out = jax.block_until_ready(out)
    assert out.shape == (batch, output_size)

    # Tight check vs. a reference using the identical bf16/f32 recipe.
    ref_matched = _reference_forward_matched(x, Z, W1, b1, W2, b2, U)
    assert jnp.allclose(out, ref_matched, atol=1e-3, rtol=1e-3), \
        "mismatch vs bf16-matched JAX reference"

    # Loose check vs. the pure-f32 PyTorch-equivalent reference (bf16 streaming
    # of activations introduces ~0.5% relative error).
    ref_f32 = _reference_forward_f32(x, Z, W1, b1, W2, b2, U)
    assert jnp.allclose(out, ref_f32, atol=5e-2, rtol=5e-2), \
        "mismatch vs f32 JAX reference"

    print("KERNEL_OK")
</pallas_src>

<mosaic_0001>
module attributes {stable_mosaic.version = 11 : i64} {
  func.func @_net_with_re_kernel(%arg0: i32, %arg1: memref<32x128xbf16, #tpu.memory_space<vmem>>, %arg2: memref<32x32xbf16, #tpu.memory_space<vmem>>, %arg3: memref<32x1xf32, #tpu.memory_space<vmem>>, %arg4: memref<8x48xbf16, #tpu.memory_space<vmem>>, %arg5: memref<8x1xf32, #tpu.memory_space<vmem>>, %arg6: memref<8x128xf32, #tpu.memory_space<vmem>>) attributes {dimension_semantics = [#tpu.dimension_semantics<parallel>], iteration_bounds = array<i64: 1>, scalar_prefetch = 0 : i64, scratch_operands = 0 : i64, tpu.core_type = #tpu.core_type<tc>, window_params = [{transform_indices = @transform_0, window_bounds = array<i64: 32, 128>}, {pipeline_mode = #tpu.pipeline_mode<synchronous>, transform_indices = @transform_1, window_bounds = array<i64: 32, 32>}, {pipeline_mode = #tpu.pipeline_mode<synchronous>, transform_indices = @transform_2, window_bounds = array<i64: 32, 1>}, {pipeline_mode = #tpu.pipeline_mode<synchronous>, transform_indices = @transform_3, window_bounds = array<i64: 8, 48>}, {pipeline_mode = #tpu.pipeline_mode<synchronous>, transform_indices = @transform_4, window_bounds = array<i64: 8, 1>}, {transform_indices = @transform_5, window_bounds = array<i64: 8, 128>}]} {
    %c0 = arith.constant 0 : index
    %c0_0 = arith.constant 0 : index
    %0 = vector.load %arg2[%c0, %c0_0] : memref<32x32xbf16, #tpu.memory_space<vmem>>, vector<32x32xbf16>
    %c0_1 = arith.constant 0 : index
    %c0_2 = arith.constant 0 : index
    %1 = vector.load %arg1[%c0_1, %c0_2] : memref<32x128xbf16, #tpu.memory_space<vmem>>, vector<32x128xbf16>
    %cst = arith.constant dense<0.000000e+00> : vector<32x128xf32>
    %2 = tpu.matmul %0, %1, %cst {dimension_numbers = #tpu.dot_dimension_numbers<[1], [0], [0], [1], [0, 0, 1, 1], [], []>} : vector<32x32xbf16>, vector<32x128xbf16>, vector<32x128xf32> -> vector<32x128xf32>
    %c0_3 = arith.constant 0 : index
    %c0_4 = arith.constant 0 : index
    %3 = vector.load %arg3[%c0_3, %c0_4] : memref<32x1xf32, #tpu.memory_space<vmem>>, vector<32x1xf32>
    %4 = vector.broadcast %3 : vector<32x1xf32> to vector<32x128xf32>
    %5 = arith.addf %2, %4 : vector<32x128xf32>
    %cst_5 = arith.constant 0.000000e+00 : f32
    %6 = vector.broadcast %cst_5 : f32 to vector<32x128xf32>
    %7 = arith.maximumf %5, %6 : vector<32x128xf32>
    %c16 = arith.constant 16 : index
    %c0_6 = arith.constant 0 : index
    %8 = vector.load %arg1[%c16, %c0_6] : memref<32x128xbf16, #tpu.memory_space<vmem>>, vector<16x128xbf16>
    %9 = arith.truncf %7 : vector<32x128xf32> to vector<32x128xbf16>
    %10 = tpu.concatenate %9, %8 in 0 : vector<32x128xbf16>, vector<16x128xbf16> -> vector<48x128xbf16>
    %c0_7 = arith.constant 0 : index
    %c0_8 = arith.constant 0 : index
    %11 = vector.load %arg4[%c0_7, %c0_8] : memref<8x48xbf16, #tpu.memory_space<vmem>>, vector<8x48xbf16>
    %cst_9 = arith.constant dense<0.000000e+00> : vector<8x128xf32>
    %12 = tpu.matmul %11, %10, %cst_9 {dimension_numbers = #tpu.dot_dimension_numbers<[1], [0], [0], [1], [0, 0, 1, 1], [], []>} : vector<8x48xbf16>, vector<48x128xbf16>, vector<8x128xf32> -> vector<8x128xf32>
    %c0_10 = arith.constant 0 : index
    %c0_11 = arith.constant 0 : index
    %13 = vector.load %arg5[%c0_10, %c0_11] : memref<8x1xf32, #tpu.memory_space<vmem>>, vector<8x1xf32>
    %14 = vector.broadcast %13 : vector<8x1xf32> to vector<8x128xf32>
    %15 = arith.addf %12, %14 : vector<8x128xf32>
    %c0_12 = arith.constant 0 : index
    %c0_13 = arith.constant 0 : index
    %16 = vector.load %arg6[%c0_12, %c0_13] : memref<8x128xf32, #tpu.memory_space<vmem>>, vector<8x128xf32>
    tpu.vector_store %arg6[%c0_12, %c0_13], %15 {strides = array<i32>} : memref<8x128xf32, #tpu.memory_space<vmem>>, vector<8x128xf32>,
    return
  }
  func.func @transform_0(%arg0: i32) -> (i32, i32) {
    %c0_i32 = arith.constant 0 : i32
    %c0_i32_0 = arith.constant 0 : i32
    return %c0_i32, %arg0 : i32, i32
  }
  func.func @transform_1(%arg0: i32) -> (i32, i32) {
    %c0_i32 = arith.constant 0 : i32
    %c0_i32_0 = arith.constant 0 : i32
    %c0_i32_1 = arith.constant 0 : i32
    return %c0_i32, %c0_i32_0 : i32, i32
  }
  func.func @transform_2(%arg0: i32) -> (i32, i32) {
    %c0_i32 = arith.constant 0 : i32
    %c0_i32_0 = arith.constant 0 : i32
    %c0_i32_1 = arith.constant 0 : i32
    return %c0_i32, %c0_i32_0 : i32, i32
  }
  func.func @transform_3(%arg0: i32) -> (i32, i32) {
    %c0_i32 = arith.constant 0 : i32
    %c0_i32_0 = arith.constant 0 : i32
    %c0_i32_1 = arith.constant 0 : i32
    return %c0_i32, %c0_i32_0 : i32, i32
  }
  func.func @transform_4(%arg0: i32) -> (i32, i32) {
    %c0_i32 = arith.constant 0 : i32
    %c0_i32_0 = arith.constant 0 : i32
    %c0_i32_1 = arith.constant 0 : i32
    return %c0_i32, %c0_i32_0 : i32, i32
  }
  func.func @transform_5(%arg0: i32) -> (i32, i32) {
    %c0_i32 = arith.constant 0 : i32
    %c0_i32_0 = arith.constant 0 : i32
    return %c0_i32, %arg0 : i32, i32
  }
}

</mosaic_0001>

<llo_original>
// kernel: tpu_custom_call.1
$region0: #{tpu_custom_call.1}
  #allocation0 [shape = 'u32[]', space=smem, size = 0x4, offset = 0x4, fixed_abs, tag = 'smem constant byte address 0x4 - core index']
  #allocation1 [shape = 'u32[144,128]{1,0:T(1,128)}', space=vmem, size = 0x12000, scoped, tag = 'internal scratch']
  %s0 = inlined_call_operand.vmem [shape: bf16[32,128], index: 0, kind: input, shape index: {}]
  %s1 = inlined_call_operand.vmem [shape: bf16[32,32], index: 1, kind: input, shape index: {}]
  %s2 = inlined_call_operand.vmem [shape: f32[32,1], index: 2, kind: input, shape index: {}]
  %s3 = inlined_call_operand.vmem [shape: bf16[8,48], index: 3, kind: input, shape index: {}]
  %s4 = inlined_call_operand.vmem [shape: f32[8,1], index: 4, kind: input, shape index: {}]
  %s5 = inlined_call_operand.hbm [shape: f32[8,128], index: 5, kind: output, shape index: {}]
  %s6 = sld [smem:[#allocation0]]
  $region30: #{tpu_custom_call.1} parent=0
    _
  %s8 = ssub.s32 1, %s6
  %s9 = scalar_select 0, %s8, %s6
  $region1: #{tpu_custom_call.1} parent=0
    #allocation2 [shape = 'u8[4096]{0}', space=vmem, size = 0x1000, scoped, tag = 'output window, operand 0, single buffered']
    #allocation3 [shape = 's32[1]{0}', space=sflag, size = 0x4, scoped, tag = 'scoped memory for tpu_custom_call.1']
    %10 = vsyncpa [#allocation3], 0
    // Predicated region
    $region2: #{tpu_custom_call.1} parent=1 // pred_check
      _
    $region3: #{tpu_custom_call.1} parent=1 // pred_check_branch
      %12 = sbr.rel (0) target = $region5
    $region4: #{tpu_custom_call.1} parent=1 // pred_region
      _
    $region5: #{tpu_custom_call.1} parent=1 // pred_fallthru
      _
    // Predicated region
    $region6: #{tpu_custom_call.1} parent=1 // pred_check
      _
    $region7: #{tpu_custom_call.1} parent=1 // pred_check_branch
      %14 = sbr.rel (0) target = $region9
    $region8: #{tpu_custom_call.1} parent=1 // pred_region
      _
    $region9: #{tpu_custom_call.1} parent=1 // pred_fallthru
      _
    // Predicated region
    $region10: #{tpu_custom_call.1} parent=1 // pred_check
      _
    $region11: #{tpu_custom_call.1} parent=1 // pred_check_branch
      %16 = sbr.rel (0) target = $region13
    $region12: #{tpu_custom_call.1} parent=1 // pred_region
      _
    $region13: #{tpu_custom_call.1} parent=1 // pred_fallthru
      _
    // Predicated region
    $region14: #{tpu_custom_call.1} parent=1 // pred_check
      _
    $region15: #{tpu_custom_call.1} parent=1 // pred_check_branch
      %18 = sbr.rel (0) target = $region17
    $region16: #{tpu_custom_call.1} parent=1 // pred_region
      _
    $region17: #{tpu_custom_call.1} parent=1 // pred_fallthru
      _
    // Predicated region
    $region18: #{tpu_custom_call.1} parent=1 // pred_check
      _
    $region19: #{tpu_custom_call.1} parent=1 // pred_check_branch
      %20 = sbr.rel (0) target = $region21
    $region20: #{tpu_custom_call.1} parent=1 // pred_region
      _
    $region21: #{tpu_custom_call.1} parent=1 // pred_fallthru
      _
    %v22 = vld [vmem:[%s1] sm:$0xf]
    %v23 = vld [vmem:[%s1 + $0x4] sm:$0xf]
    %v24 = vld [vmem:[%s1 + $0x8] sm:$0xf]
    %v25 = vld [vmem:[%s1 + $0xc] sm:$0xf]
    %v26 = vld [vmem:[%s0] sm:$0xf]
    %v27 = vld [vmem:[%s0 + $0x4] sm:$0xf]
    %v28 = vld [vmem:[%s0 + $0x8] sm:$0xf]
    %v29 = vld [vmem:[%s0 + $0xc] sm:$0xf]
    %v30 = vld [vmem:[%s2] sm:$0xff]
    %v31 = vld [vmem:[%s2 + $0x8] sm:$0xff]
    %v32 = vld [vmem:[%s2 + $0x10] sm:$0xff]
    %v33 = vld [vmem:[%s2 + $0x18] sm:$0xff]
    %35 = vset.pattern.permute.xlu0 0
    %36 = vperm.xlu0 %35, %v30
    %v37 = vpop.permute.xlu0 %36
    %40 = vset.pattern.permute.xlu0 0
    %41 = vperm.xlu0 %40, %v31
    %v42 = vpop.permute.xlu0 %41
    %45 = vset.pattern.permute.xlu0 0
    %46 = vperm.xlu0 %45, %v32
    %v47 = vpop.permute.xlu0 %46
    %50 = vset.pattern.permute.xlu0 0
    %51 = vperm.xlu0 %50, %v33
    %v52 = vpop.permute.xlu0 %51
    %v58 = vunpack.c.l.b16 %v22
    %v59 = vunpack.c.l.b16 %v23
    %v60 = vunpack.c.l.b16 %v24
    %v61 = vunpack.c.l.b16 %v25
    %v62 = vpack.c.b16 %v59, %v58
    %v63 = vpack.c.b16 %v61, %v60
    %v68 = vunpack.c.l.b16 %v26
    %v69 = vunpack.c.l.b16 %v27
    %v70 = vunpack.c.l.b16 %v28
    %v71 = vunpack.c.l.b16 %v29
    %v72 = vpack.c.b16 %v69, %v68
    %v73 = vpack.c.b16 %v71, %v70
    %vm76 = vcmask 261120
    %v78 = vsel %vm76, %v62, 0
    %v81 = vsel %vm76, %v63, 0
    %83 = vmatprep.subr.bf16.mxu0 0
    %84 = vmatpush1.bf16.msra.mxu0 0
    %85 = vmatprep.subr.bf16.mxu0 0
    %86 = vmatpush1.bf16.msra.mxu0 0
    %87 = vmatprep.subr.bf16.mxu0 0
    %88 = vmatpush1.bf16.msra.mxu0 0
    %89 = vmatprep.subr.bf16.mxu0 0
    %90 = vmatpush1.bf16.msra.mxu0 0
    %91 = vmatprep.subr.bf16.mxu0 0
    %92 = vmatpush1.bf16.msra.mxu0 0
    %93 = vmatprep.subr.bf16.mxu0 0
    %94 = vmatpush1.bf16.msra.mxu0 0
    %95 = vmatprep.subr.bf16.mxu0 0
    %96 = vmatpush1.bf16.msra.mxu0 %v73
    %97 = vmatprep.subr.bf16.mxu0 0
    %98 = vmatpush1.bf16.msra.mxu0 %v72
    %99 = vmatprep.subr.bf16.mxu0 0
    %100 = vmatpush2.bf16.msra.mxu0 0
    %101 = vmatprep.subr.bf16.mxu0 0
    %102 = vmatpush2.bf16.msra.mxu0 0
    %103 = vmatprep.subr.bf16.mxu0 0
    %104 = vmatpush2.bf16.msra.mxu0 0
    %105 = vmatprep.subr.bf16.mxu0 0
    %106 = vmatpush2.bf16.msra.mxu0 0
    %107 = vmatprep.subr.bf16.mxu0 0
    %108 = vmatpush2.bf16.msra.mxu0 0
    %109 = vmatprep.subr.bf16.mxu0 0
    %110 = vmatpush2.bf16.msra.mxu0 0
    %111 = vmatprep.subr.bf16.mxu0 0
    %112 = vmatpush2.bf16.msra.mxu0 0
    %113 = vmatprep.subr.bf16.mxu0 0
    %114 = vmatpush2.bf16.msra.mxu0 0
    %115 = vmatprep.mubr.bf16.mxu0 0
    %116 = vmatmul.mubr.bf16.gmra.mxu0 %v78
    %v117 = vpop.f32.mrf.mxu0
    %v118 = vadd.f32 %v37, %v117
    %v119 = vpop.f32.mrf.mxu0
    %v120 = vpop.f32.mrf.mxu0
    %v121 = vadd.f32 %v42, %v120
    %v122 = vpop.f32.mrf.mxu0
    %123 = vmatprep.mubr.bf16.mxu0 0
    %124 = vmatmul.mubr.bf16.gmra.mxu0 %v81
    %v125 = vpop.f32.mrf.mxu0
    %v126 = vadd.f32 %v47, %v125
    %v127 = vpop.f32.mrf.mxu0
    %v128 = vpop.f32.mrf.mxu0
    %v129 = vadd.f32 %v52, %v128
    %v130 = vpop.f32.mrf.mxu0
    %131 = vdwg.mxu0
    %v132 = vmax.f32 %v118, 0.0
    %v133 = vmax.f32 %v121, 0.0
    %v134 = vmax.f32 %v126, 0.0
    %v135 = vmax.f32 %v129, 0.0
    %v136 = vpack.c.bf16 %v133, %v132
    %v137 = vpack.c.bf16 %v135, %v134
    %v138 = vld [vmem:[%s3] sm:$0xf]
    %v139 = vld [vmem:[%s4] sm:$0xff]
    %141 = vset.pattern.permute.xlu0 0
    %142 = vperm.xlu0 %141, %v139
    %v143 = vpop.permute.xlu0 %142
    %vm145 = vcmask 392192
    %v147 = vsel %vm145, %v138, 0
    %149 = vmatprep.subr.bf16.mxu0 0
    %150 = vmatpush1.bf16.msra.mxu0 0
    %151 = vmatprep.subr.bf16.mxu0 0
    %152 = vmatpush1.bf16.msra.mxu0 0
    %153 = vmatprep.subr.bf16.mxu0 0
    %154 = vmatpush1.bf16.msra.mxu0 0
    %155 = vmatprep.subr.bf16.mxu0 0
    %156 = vmatpush1.bf16.msra.mxu0 0
    %157 = vmatprep.subr.bf16.mxu0 0
    %158 = vmatpush1.bf16.msra.mxu0 0
    %159 = vmatprep.subr.bf16.mxu0 0
    %160 = vmatpush1.bf16.msra.mxu0 %v73
    %161 = vmatprep.subr.bf16.mxu0 0
    %162 = vmatpush1.bf16.msra.mxu0 %v137
    %163 = vmatprep.subr.bf16.mxu0 0
    %164 = vmatpush1.bf16.msra.mxu0 %v136
    %165 = vmatprep.subr.bf16.mxu0 0
    %166 = vmatpush2.bf16.msra.mxu0 0
    %167 = vmatprep.subr.bf16.mxu0 0
    %168 = vmatpush2.bf16.msra.mxu0 0
    %169 = vmatprep.subr.bf16.mxu0 0
    %170 = vmatpush2.bf16.msra.mxu0 0
    %171 = vmatprep.subr.bf16.mxu0 0
    %172 = vmatpush2.bf16.msra.mxu0 0
    %173 = vmatprep.subr.bf16.mxu0 0
    %174 = vmatpush2.bf16.msra.mxu0 0
    %175 = vmatprep.subr.bf16.mxu0 0
    %176 = vmatpush2.bf16.msra.mxu0 0
    %177 = vmatprep.subr.bf16.mxu0 0
    %178 = vmatpush2.bf16.msra.mxu0 0
    %179 = vmatprep.subr.bf16.mxu0 0
    %180 = vmatpush2.bf16.msra.mxu0 0
    %181 = vmatprep.mubr.bf16.mxu0 0
    %182 = vmatmul.mubr.bf16.gmra.mxu0 %v147
    %v183 = vpop.f32.mrf.mxu0
    %v184 = vadd.f32 %v143, %v183
    %v185 = vpop.f32.mrf.mxu0
    %v186 = vpop.f32.mrf.mxu0
    %v187 = vpop.f32.mrf.mxu0
    %188 = vdwg.mxu0
    %189 = vst [vmem:[#allocation2] sm:$0xff] %v184
    // Predicated region
    $region22: #{tpu_custom_call.1} parent=1 // pred_check
      _
    $region23: #{tpu_custom_call.1} parent=1 // pred_check_branch
      %191 = sbr.rel (0) target = $region25
    $region24: #{tpu_custom_call.1} parent=1 // pred_region
      %s193 = ssub.s32 128, 128
      %194 = vsyncadd [#allocation3], %s193
      %s196 = sshll.u32 [#allocation2], 4
      %s197 = int_to_ptr.vmem [resolvable:$true] %s196
      %199 = dma.vmem_to_hbm [thread:$0]  %s197, 128, %s5, [#allocation3]
    $region25: #{tpu_custom_call.1} parent=1 // pred_fallthru
      _
    // Predicated region
    $region26: #{tpu_custom_call.1} parent=1 // pred_check
      _
    $region27: #{tpu_custom_call.1} parent=1 // pred_check_branch
      %201 = sbr.rel (0) target = $region29
    $region28: #{tpu_custom_call.1} parent=1 // pred_region
      %202 = dma.done [#allocation3], 128
    $region29: #{tpu_custom_call.1} parent=1 // pred_fallthru
      _
    %203 = vsyncpa [#allocation3], 1

</llo_original>
